<compile_context>
chip_gen: v7x
topology: tpu7x:2x2x1
jax: 0.10.0
libtpu: 0.0.40
codegen_flags: <defaults>
</compile_context>

<pallas_src>
import functools

import numpy as np
import jax
import jax.numpy as jnp
from jax.experimental import pallas as pl
from jax.experimental.pallas import tpu as pltpu


def _round_up(v, m):
    return ((v + m - 1) // m) * m


_HW_CONFIG = None


def _tpu_config():
    """(vmem_limit_bytes, prefer_split) derived from the local chip, with safe fallbacks."""
    global _HW_CONFIG
    if _HW_CONFIG is not None:
        return _HW_CONFIG
    vmem_cap = 128 * 1024 * 1024
    num_cores = 1
    try:
        info = pltpu.get_tpu_info()
        vmem_cap = int(getattr(info, "vmem_capacity_bytes", vmem_cap))
        for attr in ("num_cores", "num_tensorcores", "tensorcore_count"):
            v = getattr(info, attr, None)
            if v:
                num_cores = int(v)
                break
    except Exception:
        pass
    # ~3/4 of physical VMEM: v5e/v6e (128 MiB) -> 96 MiB, v7x (64 MiB per TC) -> 48 MiB.
    vmem_limit = int(min(vmem_cap * 3 // 4, 100 * 1024 * 1024))
    # v7x heuristic: 2 TensorCores / 64 MiB VMEM -> prefer >=2 channel tiles so the
    # "parallel" grid axis can be sharded across both cores.
    prefer_split = (num_cores >= 2) or (vmem_cap <= 64 * 1024 * 1024)
    _HW_CONFIG = (vmem_limit, prefer_split)
    return _HW_CONFIG


def _pick_channel_tile(c, hw, in_itemsize, vmem_limit, prefer_split):
    """Largest legal channel tile (multiple of 8, or == c) fitting the VMEM budget."""
    lanes = _round_up(hw, 128)
    # Per-channel VMEM residency: 2x double-buffered input row (input dtype)
    # + 1x f32 x_m scratch row + ~1 f32 body temporary row.
    per_ch = lanes * (2 * in_itemsize + 4 + 4)
    cap = max(1, int(vmem_limit * 0.7) // per_ch)

    valid = [d for d in range(8, c, 8) if c % d == 0]   # multiples of 8 dividing c
    valid.append(c)                                     # tc == c is always block-legal
    valid = sorted(set(valid))

    fitting = [d for d in valid if d <= cap]
    if not fitting:
        # TODO(synk): no h/w tiling fallback — for extremely large h*w even the smallest
        # legal channel tile may exceed the VMEM budget.
        return valid[0]
    tc = fitting[-1]
    if prefer_split and c // tc < 2:
        split = [d for d in fitting if c // d >= 2]
        if split:
            tc = split[-1]     # largest fitting tile that still yields >=2 grid tiles
    return tc


def _row_entropy_sum(v):
    """Sum over rows of entropy(softmax(v, axis=-1)); v is 2D (rows, k) float32."""
    m = jnp.max(v, axis=-1, keepdims=True)
    sh = v - m
    e = jnp.exp(sh)
    z = jnp.sum(e, axis=-1, keepdims=True)
    # entropy = log Z - sum(e * sh) / Z   (algebraically == -sum(p * log p))
    ent = jnp.log(z) - jnp.sum(e * sh, axis=-1, keepdims=True) / z
    return jnp.sum(ent)


def _make_kernel(n_total, h, accumulate):
    inv_n = 1.0 / float(n_total)

    def kernel(pool_ref, x_ref, out_ref, xm_ref):
        ni = pl.program_id(1)
        x = x_ref[0].astype(jnp.float32)                      # (tc, h*w), lane-dense

        @pl.when(ni == 0)
        def _():
            xm_ref[...] = jnp.zeros_like(xm_ref)
            if accumulate:
                out_ref[...] = jnp.zeros_like(out_ref)

        # Batch-sum for x_m: one read-modify-write pass over the block.
        xm_ref[...] += x

        # h- and w-pooling in a single MXU matmul: (tc, hw) @ (hw, h + w).
        pooled = jnp.dot(x, pool_ref[...], preferred_element_type=jnp.float32)
        s_h = _row_entropy_sum(pooled[:, :h])                 # sum over tc channels
        s_w = _row_entropy_sum(pooled[:, h:])

        if accumulate:
            # reduction == 'mean': output tile is resident across the batch axis;
            # accumulate in place (no per-step HBM writeback, no iota/selects).
            out_ref[0:1, :] += s_h
            out_ref[1:2, :] += s_w
        else:
            # reduction == 'none': one fresh tile per (channel-tile, batch) step.
            row = jax.lax.broadcasted_iota(jnp.int32, (8, 128), 0)
            out_ref[...] = jnp.where(row == 0, s_h,
                                     jnp.where(row == 1, s_w, 0.0))

        @pl.when(ni == n_total - 1)
        def _():
            # Finalize x_m entropy (plain lane-axis softmax entropy on the flat scratch).
            s_m = _row_entropy_sum(xm_ref[...] * inv_n)
            out_ref[2:3, :] = jnp.broadcast_to(s_m, (1, 128)).astype(out_ref.dtype)

    return kernel


@functools.partial(jax.jit, static_argnames=("reduction",))
def _simcc_loss_impl(x, reduction="mean"):
    if reduction not in ("mean", "none"):
        raise ValueError(f"unsupported reduction: {reduction!r}")
    n, c, h, w = x.shape
    hw = h * w
    accumulate = reduction == "mean"

    vmem_limit, prefer_split = _tpu_config()
    tc = _pick_channel_tile(c, hw, jnp.dtype(x.dtype).itemsize, vmem_limit, prefer_split)
    num_c_tiles = c // tc

    # Flatten spatial dims (free bitcast) -> lane-dense VMEM tiles.
    x_flat = x.reshape(n, c, hw)

    # (h*w, h+w) averaging matrix: column j<h averages over w (x_h row j),
    # column h+j averages over h (x_w column j).  One MXU matmul does both poolings.
    rows = jnp.arange(hw)
    p_h = jax.nn.one_hot(rows // w, h, dtype=jnp.float32) * (1.0 / w)
    p_w = jax.nn.one_hot(rows % w, w, dtype=jnp.float32) * (1.0 / h)
    pool = jnp.concatenate([p_h, p_w], axis=1)                 # (hw, h + w)

    out_cols = 128 if accumulate else n * 128
    if accumulate:
        out_index = lambda ci, ni: (ci, 0)     # resident accumulator per channel tile
    else:
        out_index = lambda ci, ni: (ci, ni)    # per-(channel-tile, batch) tile

    out = pl.pallas_call(
        _make_kernel(n, h, accumulate),
        out_shape=jax.ShapeDtypeStruct((num_c_tiles * 8, out_cols), jnp.float32),
        grid_spec=pltpu.PrefetchScalarGridSpec(
            num_scalar_prefetch=0,
            grid=(num_c_tiles, n),
            in_specs=[
                pl.BlockSpec((hw, h + w), lambda ci, ni: (0, 0)),     # pooling matrix (resident)
                pl.BlockSpec((1, tc, hw), lambda ci, ni: (ni, ci, 0)),
            ],
            out_specs=pl.BlockSpec((8, 128), out_index),
            scratch_shapes=[pltpu.VMEM((tc, hw), jnp.float32)],
        ),
        compiler_params=pltpu.CompilerParams(
            dimension_semantics=("parallel", "arbitrary"),
            vmem_limit_bytes=vmem_limit,
        ),
    )(pool, x_flat)

    inv_hw = 1.0 / float(hw)
    if accumulate:
        blk = out.reshape(num_c_tiles, 8, 128)
        ent_h = jnp.sum(blk[:, 0, 0]) / float(n * c) * inv_hw
        ent_w = jnp.sum(blk[:, 1, 0]) / float(n * c) * inv_hw
        ent_m = jnp.sum(blk[:, 2, 0]) / float(c) * inv_hw
        return ent_h + ent_w - ent_m
    blk = out.reshape(num_c_tiles, 8, n, 128)
    ent_h = jnp.sum(blk[:, 0, :, 0], axis=0) / float(c) * inv_hw       # (n,)
    ent_w = jnp.sum(blk[:, 1, :, 0], axis=0) / float(c) * inv_hw       # (n,)
    ent_m = jnp.sum(blk[:, 2, n - 1, 0]) / float(c) * inv_hw           # scalar
    return ent_h + ent_w - ent_m


def simcc_loss(x, threshold=-1, reduction="mean"):
    if threshold > 0:
        # TODO(synk): `ent[ent < threshold]` is dynamic-shape boolean indexing; no static-shape Pallas equivalent.
        raise NotImplementedError("threshold > 0 (dynamic boolean filtering) is not supported")
    return _simcc_loss_impl(x, reduction=reduction)


class SimCCLoss:
    """Functional equivalent of the PyTorch SimCCLoss module (forward pass)."""

    def __init__(self, reduction="mean"):
        self.reduction = reduction

    def __call__(self, x, threshold=-1):
        return simcc_loss(x, threshold=threshold, reduction=self.reduction)


def _reference(x, reduction="mean"):
    """Pure-JAX reference with identical semantics (for sanity check)."""
    n, c, h, w = x.shape
    x32 = x.astype(jnp.float32)

    def ent(v):
        p = jax.nn.softmax(v, axis=-1)
        logp = jax.nn.log_softmax(v, axis=-1)
        return -jnp.sum(p * logp, axis=-1) / (h * w)

    ent_h = ent(jnp.mean(x32, axis=-1))                          # (n, c)
    ent_w = ent(jnp.mean(x32, axis=-2))                          # (n, c)
    ent_m = ent(jnp.mean(x32.reshape(n, c, -1), axis=0))         # (c,)
    if reduction == "mean":
        return jnp.mean(ent_h) + jnp.mean(ent_w) - jnp.mean(ent_m)
    return jnp.mean(ent_h, axis=-1) + jnp.mean(ent_w, axis=-1) - jnp.mean(ent_m)


if __name__ == "__main__":
    key = jax.random.PRNGKey(0)
    k1, k2 = jax.random.split(key)

    # primary shape: batch=2, channels=4, spatial 16x16
    x = jax.random.normal(k1, (2, 4, 16, 16), dtype=jnp.float32)
    loss = SimCCLoss(reduction="mean")(x)
    jax.block_until_ready(loss)
    np.testing.assert_allclose(np.asarray(loss), np.asarray(_reference(x)),
                               rtol=1e-4, atol=5e-6)

    # second shape: exercises >2 batch-accumulation steps + reduction='none'
    x2 = jax.random.normal(k2, (3, 8, 16, 16), dtype=jnp.float32)
    loss2 = simcc_loss(x2)
    loss2_none = simcc_loss(x2, reduction="none")
    jax.block_until_ready((loss2, loss2_none))
    np.testing.assert_allclose(np.asarray(loss2), np.asarray(_reference(x2)),
                               rtol=1e-4, atol=5e-6)
    np.testing.assert_allclose(np.asarray(loss2_none),
                               np.asarray(_reference(x2, "none")),
                               rtol=1e-4, atol=5e-6)

    print("KERNEL_OK")
</pallas_src>

<mosaic_0001>
module attributes {stable_mosaic.version = 11 : i64} {
  func.func @kernel(%arg0: i32, %arg1: i32, %arg2: memref<256x32xf32, #tpu.memory_space<vmem>>, %arg3: memref<1x4x256xf32, #tpu.memory_space<vmem>>, %arg4: memref<8x128xf32, #tpu.memory_space<vmem>>, %arg5: memref<4x256xf32, #tpu.memory_space<vmem>>) attributes {dimension_semantics = [#tpu.dimension_semantics<parallel>, #tpu.dimension_semantics<arbitrary>], iteration_bounds = array<i64: 1, 2>, scalar_prefetch = 0 : i64, scratch_operands = 1 : i64, tpu.core_type = #tpu.core_type<tc>, window_params = [{pipeline_mode = #tpu.pipeline_mode<synchronous>, transform_indices = @transform_0, window_bounds = array<i64: 256, 32>}, {transform_indices = @transform_1, window_bounds = array<i64: 1, 4, 256>}, {transform_indices = @transform_2, window_bounds = array<i64: 8, 128>}]} {
    %c0 = arith.constant 0 : index
    %c0_0 = arith.constant 0 : index
    %c0_1 = arith.constant 0 : index
    %0 = vector.load %arg3[%c0, %c0_0, %c0_1] : memref<1x4x256xf32, #tpu.memory_space<vmem>>, vector<1x4x256xf32>
    %1 = vector.shape_cast %0 : vector<1x4x256xf32> to vector<4x256xf32>
    %c0_i32 = arith.constant 0 : i32
    %2 = arith.cmpi eq, %arg1, %c0_i32 : i32
    %3 = arith.extui %2 : i1 to i32
    %c0_i32_2 = arith.constant 0 : i32
    %4 = arith.cmpi ne, %3, %c0_i32_2 : i32
    scf.if %4 {
      %cst_25 = arith.constant 0.000000e+00 : f32
      %57 = vector.broadcast %cst_25 : f32 to vector<4x256xf32>
      %c0_26 = arith.constant 0 : index
      %c0_27 = arith.constant 0 : index
      %58 = vector.load %arg5[%c0_26, %c0_27] : memref<4x256xf32, #tpu.memory_space<vmem>>, vector<4x256xf32>
      tpu.vector_store %arg5[%c0_26, %c0_27], %57 {strides = array<i32>} : memref<4x256xf32, #tpu.memory_space<vmem>>, vector<4x256xf32>,
      %cst_28 = arith.constant 0.000000e+00 : f32
      %59 = vector.broadcast %cst_28 : f32 to vector<8x128xf32>
      %c0_29 = arith.constant 0 : index
      %c0_30 = arith.constant 0 : index
      %60 = vector.load %arg4[%c0_29, %c0_30] : memref<8x128xf32, #tpu.memory_space<vmem>>, vector<8x128xf32>
      tpu.vector_store %arg4[%c0_29, %c0_30], %59 {strides = array<i32>} : memref<8x128xf32, #tpu.memory_space<vmem>>, vector<8x128xf32>,
    } else {
    }
    %c0_3 = arith.constant 0 : index
    %c0_4 = arith.constant 0 : index
    %5 = vector.load %arg5[%c0_3, %c0_4] : memref<4x256xf32, #tpu.memory_space<vmem>>, vector<4x256xf32>
    %6 = arith.addf %5, %1 : vector<4x256xf32>
    %c0_5 = arith.constant 0 : index
    %c0_6 = arith.constant 0 : index
    %7 = vector.load %arg5[%c0_5, %c0_6] : memref<4x256xf32, #tpu.memory_space<vmem>>, vector<4x256xf32>
    tpu.vector_store %arg5[%c0_5, %c0_6], %6 {strides = array<i32>} : memref<4x256xf32, #tpu.memory_space<vmem>>, vector<4x256xf32>,
    %c0_7 = arith.constant 0 : index
    %c0_8 = arith.constant 0 : index
    %8 = vector.load %arg2[%c0_7, %c0_8] : memref<256x32xf32, #tpu.memory_space<vmem>>, vector<256x32xf32>
    %cst = arith.constant dense<0.000000e+00> : vector<4x32xf32>
    %9 = tpu.matmul %1, %8, %cst {dimension_numbers = #tpu.dot_dimension_numbers<[1], [0], [0], [1], [0, 0, 1, 1], [], []>} : vector<4x256xf32>, vector<256x32xf32>, vector<4x32xf32> -> vector<4x32xf32>
    %10 = vector.extract_strided_slice %9 {offsets = [0, 0], sizes = [4, 16], strides = [1, 1]} : vector<4x32xf32> to vector<4x16xf32>
    %cst_9 = arith.constant dense<0xFF800000> : vector<4xf32>
    %11 = vector.multi_reduction <maximumf>, %10, %cst_9 [1] : vector<4x16xf32> to vector<4xf32>
    %12 = vector.shape_cast %11 : vector<4xf32> to vector<4x1xf32>
    %13 = vector.broadcast %12 : vector<4x1xf32> to vector<4x16xf32>
    %14 = arith.subf %10, %13 : vector<4x16xf32>
    %15 = math.exp %14 : vector<4x16xf32>
    %cst_10 = arith.constant dense<0.000000e+00> : vector<4xf32>
    %16 = vector.multi_reduction <add>, %15, %cst_10 [1] : vector<4x16xf32> to vector<4xf32>
    %17 = vector.shape_cast %16 : vector<4xf32> to vector<4x1xf32>
    %18 = math.log %17 : vector<4x1xf32>
    %19 = arith.mulf %15, %14 : vector<4x16xf32>
    %cst_11 = arith.constant dense<0.000000e+00> : vector<4xf32>
    %20 = vector.multi_reduction <add>, %19, %cst_11 [1] : vector<4x16xf32> to vector<4xf32>
    %21 = vector.shape_cast %20 : vector<4xf32> to vector<4x1xf32>
    %22 = arith.divf %21, %17 : vector<4x1xf32>
    %23 = arith.subf %18, %22 : vector<4x1xf32>
    %24 = vector.shape_cast %23 : vector<4x1xf32> to vector<1x4x1xf32>
    %cst_12 = arith.constant dense<0.000000e+00> : vector<1xf32>
    %25 = vector.multi_reduction <add>, %24, %cst_12 [1, 2] : vector<1x4x1xf32> to vector<1xf32>
    %26 = vector.shape_cast %25 : vector<1xf32> to vector<1x1x1xf32>
    %27 = vector.extract %26[0, 0, 0] : f32 from vector<1x1x1xf32>
    %28 = vector.extract_strided_slice %9 {offsets = [0, 16], sizes = [4, 16], strides = [1, 1]} : vector<4x32xf32> to vector<4x16xf32>
    %cst_13 = arith.constant dense<0xFF800000> : vector<4xf32>
    %29 = vector.multi_reduction <maximumf>, %28, %cst_13 [1] : vector<4x16xf32> to vector<4xf32>
    %30 = vector.shape_cast %29 : vector<4xf32> to vector<4x1xf32>
    %31 = vector.broadcast %30 : vector<4x1xf32> to vector<4x16xf32>
    %32 = arith.subf %28, %31 : vector<4x16xf32>
    %33 = math.exp %32 : vector<4x16xf32>
    %cst_14 = arith.constant dense<0.000000e+00> : vector<4xf32>
    %34 = vector.multi_reduction <add>, %33, %cst_14 [1] : vector<4x16xf32> to vector<4xf32>
    %35 = vector.shape_cast %34 : vector<4xf32> to vector<4x1xf32>
    %36 = math.log %35 : vector<4x1xf32>
    %37 = arith.mulf %33, %32 : vector<4x16xf32>
    %cst_15 = arith.constant dense<0.000000e+00> : vector<4xf32>
    %38 = vector.multi_reduction <add>, %37, %cst_15 [1] : vector<4x16xf32> to vector<4xf32>
    %39 = vector.shape_cast %38 : vector<4xf32> to vector<4x1xf32>
    %40 = arith.divf %39, %35 : vector<4x1xf32>
    %41 = arith.subf %36, %40 : vector<4x1xf32>
    %42 = vector.shape_cast %41 : vector<4x1xf32> to vector<1x4x1xf32>
    %cst_16 = arith.constant dense<0.000000e+00> : vector<1xf32>
    %43 = vector.multi_reduction <add>, %42, %cst_16 [1, 2] : vector<1x4x1xf32> to vector<1xf32>
    %44 = vector.shape_cast %43 : vector<1xf32> to vector<1x1x1xf32>
    %45 = vector.extract %44[0, 0, 0] : f32 from vector<1x1x1xf32>
    %c0_17 = arith.constant 0 : index
    %c0_18 = arith.constant 0 : index
    %46 = vector.load %arg4[%c0_17, %c0_18] : memref<8x128xf32, #tpu.memory_space<vmem>>, vector<1x128xf32>
    %47 = vector.broadcast %27 : f32 to vector<1x128xf32>
    %48 = arith.addf %46, %47 : vector<1x128xf32>
    %c0_19 = arith.constant 0 : index
    %c0_20 = arith.constant 0 : index
    %49 = vector.load %arg4[%c0_19, %c0_20] : memref<8x128xf32, #tpu.memory_space<vmem>>, vector<1x128xf32>
    tpu.vector_store %arg4[%c0_19, %c0_20], %48 {strides = array<i32>} : memref<8x128xf32, #tpu.memory_space<vmem>>, vector<1x128xf32>,
    %c1 = arith.constant 1 : index
    %c0_21 = arith.constant 0 : index
    %50 = vector.load %arg4[%c1, %c0_21] : memref<8x128xf32, #tpu.memory_space<vmem>>, vector<1x128xf32>
    %51 = vector.broadcast %45 : f32 to vector<1x128xf32>
    %52 = arith.addf %50, %51 : vector<1x128xf32>
    %c1_22 = arith.constant 1 : index
    %c0_23 = arith.constant 0 : index
    %53 = vector.load %arg4[%c1_22, %c0_23] : memref<8x128xf32, #tpu.memory_space<vmem>>, vector<1x128xf32>
    tpu.vector_store %arg4[%c1_22, %c0_23], %52 {strides = array<i32>} : memref<8x128xf32, #tpu.memory_space<vmem>>, vector<1x128xf32>,
    %c1_i32 = arith.constant 1 : i32
    %54 = arith.cmpi eq, %arg1, %c1_i32 : i32
    %55 = arith.extui %54 : i1 to i32
    %c0_i32_24 = arith.constant 0 : i32
    %56 = arith.cmpi ne, %55, %c0_i32_24 : i32
    scf.if %56 {
      %c0_25 = arith.constant 0 : index
      %c0_26 = arith.constant 0 : index
      %57 = vector.load %arg5[%c0_25, %c0_26] : memref<4x256xf32, #tpu.memory_space<vmem>>, vector<4x256xf32>
      %cst_27 = arith.constant 5.000000e-01 : f32
      %58 = vector.broadcast %cst_27 : f32 to vector<4x256xf32>
      %59 = arith.mulf %57, %58 : vector<4x256xf32>
      %cst_28 = arith.constant dense<0xFF800000> : vector<4xf32>
      %60 = vector.multi_reduction <maximumf>, %59, %cst_28 [1] : vector<4x256xf32> to vector<4xf32>
      %61 = vector.shape_cast %60 : vector<4xf32> to vector<4x1xf32>
      %62 = vector.broadcast %61 : vector<4x1xf32> to vector<4x256xf32>
      %63 = arith.subf %59, %62 : vector<4x256xf32>
      %64 = math.exp %63 : vector<4x256xf32>
      %cst_29 = arith.constant dense<0.000000e+00> : vector<4xf32>
      %65 = vector.multi_reduction <add>, %64, %cst_29 [1] : vector<4x256xf32> to vector<4xf32>
      %66 = vector.shape_cast %65 : vector<4xf32> to vector<4x1xf32>
      %67 = math.log %66 : vector<4x1xf32>
      %68 = arith.mulf %64, %63 : vector<4x256xf32>
      %cst_30 = arith.constant dense<0.000000e+00> : vector<4xf32>
      %69 = vector.multi_reduction <add>, %68, %cst_30 [1] : vector<4x256xf32> to vector<4xf32>
      %70 = vector.shape_cast %69 : vector<4xf32> to vector<4x1xf32>
      %71 = arith.divf %70, %66 : vector<4x1xf32>
      %72 = arith.subf %67, %71 : vector<4x1xf32>
      %73 = vector.shape_cast %72 : vector<4x1xf32> to vector<1x4x1xf32>
      %cst_31 = arith.constant dense<0.000000e+00> : vector<1xf32>
      %74 = vector.multi_reduction <add>, %73, %cst_31 [1, 2] : vector<1x4x1xf32> to vector<1xf32>
      %75 = vector.shape_cast %74 : vector<1xf32> to vector<1x1x1xf32>
      %76 = vector.extract %75[0, 0, 0] : f32 from vector<1x1x1xf32>
      %77 = vector.broadcast %76 : f32 to vector<1x128xf32>
      %c2 = arith.constant 2 : index
      %c0_32 = arith.constant 0 : index
      %78 = vector.load %arg4[%c2, %c0_32] : memref<8x128xf32, #tpu.memory_space<vmem>>, vector<1x128xf32>
      tpu.vector_store %arg4[%c2, %c0_32], %77 {strides = array<i32>} : memref<8x128xf32, #tpu.memory_space<vmem>>, vector<1x128xf32>,
    } else {
    }
    return
  }
  func.func @transform_0(%arg0: i32, %arg1: i32) -> (i32, i32) {
    %c0_i32 = arith.constant 0 : i32
    %c0_i32_0 = arith.constant 0 : i32
    %c0_i32_1 = arith.constant 0 : i32
    return %c0_i32, %c0_i32_0 : i32, i32
  }
  func.func @transform_1(%arg0: i32, %arg1: i32) -> (i32, i32, i32) {
    %c0_i32 = arith.constant 0 : i32
    %c0_i32_0 = arith.constant 0 : i32
    return %arg1, %arg0, %c0_i32 : i32, i32, i32
  }
  func.func @transform_2(%arg0: i32, %arg1: i32) -> (i32, i32) {
    %c0_i32 = arith.constant 0 : i32
    %c0_i32_0 = arith.constant 0 : i32
    return %arg0, %c0_i32 : i32, i32
  }
}

</mosaic_0001>

<llo_original>
// kernel: _simcc_loss_impl.1
$region0: #{_simcc_loss_impl.1}
  #allocation0 [shape = 'u32[]', space=smem, size = 0x4, offset = 0x4, fixed_abs, tag = 'smem constant byte address 0x4 - core index']
  #allocation1 [shape = 'u32[144,128]{1,0:T(1,128)}', space=vmem, size = 0x12000, scoped, tag = 'internal scratch']
  #allocation2 [shape = 'f32[4,256]{1,0:T(4,128)}', space=vmem, size = 0x1000, scoped, tag = 'scratch operand']
  %s0 = inlined_call_operand.hbm [shape: f32[256,32], index: 0, kind: input, shape index: {}]
  %s1 = inlined_call_operand.hbm [shape: f32[2,4,256], index: 1, kind: input, shape index: {}]
  %s2 = inlined_call_operand.hbm [shape: f32[8,128], index: 2, kind: output, shape index: {}]
  %s3 = sld [smem:[#allocation0]]
  $region57: #{_simcc_loss_impl.1} parent=0
    _
  %s5 = ssub.s32 1, %s3
  %s6 = scalar_select 0, %s5, %s3
  $region1: #{_simcc_loss_impl.1} parent=0
    #allocation3 [shape = 'u8[131072]{0}', space=vmem, size = 0x20000, scoped, tag = 'input window, operand 0, single buffered']
    #allocation4 [shape = 's32[2]{0}', space=sflag, size = 0x8, scoped, tag = 'scoped memory for _simcc_loss_impl.1']
    #allocation5 [shape = 's32[2]{0}', space=sflag, size = 0x8, scoped, tag = 'scoped memory for _simcc_loss_impl.1']
    #allocation6 [shape = 'u8[8192]{0}', space=vmem, size = 0x2000, scoped, tag = 'input window, operand 1']
    #allocation7 [shape = 's32[2]{0}', space=sflag, size = 0x8, scoped, tag = 'scoped memory for _simcc_loss_impl.1']
    #allocation8 [shape = 'u8[4096]{0}', space=vmem, size = 0x1000, scoped, tag = 'output window, operand 0, single buffered']
    %7 = vsyncpa [#allocation4], 0
    %8 = vsyncpa [#allocation7], 0
    %s9 = scalar_lea.sflag [#allocation7], 1
    %10 = vsyncpa %s9, 0
    %11 = vsyncpa [#allocation5], 0
    loop: start=0, step=1, limit=4
    $region2: #{_simcc_loss_impl.1} parent=1 // loop_pre_header
      _
    $region3: #{_simcc_loss_impl.1} parent=1 // loop_header
      %s13 = sphi 0, %s17
      %p14 = scmp.ge.s32.totalorder %s13, 4
      %s20 = sphi 0, %s32
      %s21 = sphi 0, %s28
      %s22 = sphi 0, %s20
      %s23 = sphi 0, %s21
      %s24 = sphi 0, %s22
      %s25 = sphi 0, %s23
      %s33 = sphi 0, %s33
      %s35 = sphi 0, %s33
      %s36 = sphi 0, %s35
      %s50 = sphi 0, %s36
      %s58 = sphi 0, %s60
      %s61 = sphi 0, %s58
      %s62 = sphi 0, %s61
      %s78 = sphi 0, %s62
      %s84 = sphi 0, %s86
      %s87 = sphi 0, %s84
      %s88 = sphi 0, %s87
      %s104 = sphi 0, %s88
    $region4: #{_simcc_loss_impl.1} parent=1 // loop_header_branch
      %16 = sbr.rel (%p14) target = $region8
    $region5: #{_simcc_loss_impl.1} parent=1 // loop_body
      %s18 = ssub.s32 %s13, 1
      %s19 = ssub.s32 %s13, 2
      %s26 = sadd.s32 1, %s21
      %p27 = scmp.ge.s32.totalorder %s26, 2
      %s28 = scalar_select %p27, 0, %s26
      %s29 = sadd.s32 1, %s20
      %s30 = scalar_select %p27, %s29, %s20
      %p31 = scmp.ge.s32.totalorder %s30, 1
      %s32 = scalar_select %p31, 0, %s30
      %s34 = sadd.s32 %s33, 1
      %p37 = scmp.eq.s32.totalorder %s13, 1
      %p38 = scmp.ne.s32.totalorder %s33, %s35
      %p39 = scmp.eq.s32.totalorder %s13, 0
      %p40 = por %p38, %p39
      %p41 = scmp.ne.s32.totalorder %s33, %s35
      %p42 = scmp.eq.s32.totalorder %s18, 1
      %p43 = por %p41, %p42
      %p44 = scmp.ne.s32.totalorder %s35, %s36
      %p45 = scmp.eq.s32.totalorder %s18, 0
      %p46 = por %p44, %p45
      %p47 = scmp.ne.s32.totalorder %s35, %s36
      %p48 = scmp.eq.s32.totalorder %s19, 1
      %p49 = por %p47, %p48
      %p51 = scmp.ne.s32.totalorder %s36, %s50
      %p52 = scmp.eq.s32.totalorder %s19, 0
      %p53 = por %p51, %p52
      %s54 = ssub.s32 %s21, %s28
      %s55 = ssub.s32 %s20, %s32
      %s56 = sor.u32 %s54, %s55
      %p57 = scmp.eq.s32.totalorder %s56, 0
      %s59 = sadd.s32 %s58, 1
      %s60 = scalar_select %p57, %s58, %s59
      %p63 = pneg %p57
      %p64 = scmp.eq.s32.totalorder %s13, 1
      %p65 = por %p63, %p64
      %p66 = scmp.ne.s32.totalorder %s58, %s61
      %p67 = scmp.eq.s32.totalorder %s13, 0
      %p68 = por %p66, %p67
      %p69 = scmp.ne.s32.totalorder %s58, %s61
      %p70 = scmp.eq.s32.totalorder %s18, 1
      %p71 = por %p69, %p70
      %p72 = scmp.ne.s32.totalorder %s61, %s62
      %p73 = scmp.eq.s32.totalorder %s18, 0
      %p74 = por %p72, %p73
      %p75 = scmp.ne.s32.totalorder %s61, %s62
      %p76 = scmp.eq.s32.totalorder %s19, 1
      %p77 = por %p75, %p76
      %p79 = scmp.ne.s32.totalorder %s62, %s78
      %p80 = scmp.eq.s32.totalorder %s19, 0
      %p81 = por %p79, %p80
      %s82 = ssub.s32 %s20, %s32
      %p83 = scmp.eq.s32.totalorder %s82, 0
      %s85 = sadd.s32 %s84, 1
      %s86 = scalar_select %p83, %s84, %s85
      %p89 = pneg %p83
      %p90 = scmp.eq.s32.totalorder %s13, 1
      %p91 = por %p89, %p90
      %p92 = scmp.ne.s32.totalorder %s84, %s87
      %p93 = scmp.eq.s32.totalorder %s13, 0
      %p94 = por %p92, %p93
      %p95 = scmp.ne.s32.totalorder %s84, %s87
      %p96 = scmp.eq.s32.totalorder %s18, 1
      %p97 = por %p95, %p96
      %p98 = scmp.ne.s32.totalorder %s87, %s88
      %p99 = scmp.eq.s32.totalorder %s18, 0
      %p100 = por %p98, %p99
      %p101 = scmp.ne.s32.totalorder %s87, %s88
      %p102 = scmp.eq.s32.totalorder %s19, 1
      %p103 = por %p101, %p102
      %p105 = scmp.ne.s32.totalorder %s88, %s104
      %p106 = scmp.eq.s32.totalorder %s19, 0
      %p107 = por %p105, %p106
      %p108 = scmp.le.s32.totalorder 1, %s13
      %p109 = scmp.lt.s32.totalorder %s13, 3
      %p110 = pnand %p108, %p109
      %p111 = pneg %p110
      // Predicated region
      $region9: #{_simcc_loss_impl.1} parent=5 // pred_check
        _
      $region10: #{_simcc_loss_impl.1} parent=5 // pred_check_branch
        %113 = sbr.rel (%p110) target = $region12
      $region11: #{_simcc_loss_impl.1} parent=5 // pred_region
        %s114 = ssub.s32 %s13, 1
        // Predicated region
        $region13: #{_simcc_loss_impl.1} parent=11 // pred_check
          %p115 = pneg %p46
        $region14: #{_simcc_loss_impl.1} parent=11 // pred_check_branch
          %117 = sbr.rel (%p115) target = $region16
        $region15: #{_simcc_loss_impl.1} parent=11 // pred_region
          %s119 = ssub.s32 4096, 4096
          %120 = vsyncadd [#allocation4], %s119
          %s121 = sshll.u32 [#allocation3], 4
          %s122 = int_to_ptr.vmem [resolvable:$true] %s121
          %127 = dma.hbm_to_vmem [thread:$0]  %s0, 4096, %s122, [#allocation4], 128, 128, 8
        $region16: #{_simcc_loss_impl.1} parent=11 // pred_fallthru
          _
      $region12: #{_simcc_loss_impl.1} parent=5 // pred_fallthru
        _
      %p128 = scmp.lt.s32.totalorder %s13, 2
      // Predicated region
      $region17: #{_simcc_loss_impl.1} parent=5 // pred_check
        %p129 = pneg %p128
      $region18: #{_simcc_loss_impl.1} parent=5 // pred_check_branch
        %131 = sbr.rel (%p129) target = $region20
      $region19: #{_simcc_loss_impl.1} parent=5 // pred_region
        // Predicated region
        $region21: #{_simcc_loss_impl.1} parent=19 // pred_check
          %p132 = pneg %p68
        $region22: #{_simcc_loss_impl.1} parent=19 // pred_check_branch
          %134 = sbr.rel (%p132) target = $region24
        $region23: #{_simcc_loss_impl.1} parent=19 // pred_region
          %s135 = sand.u32 %s58, 1
          %s136 = scalar_lea.sflag [#allocation7], %s135
          %s137 = sand.u32 %s58, 1
          %s138 = smul.addr %s137, 8
          %s139 = scalar_lea.vmem [#allocation6], %s138
          %s141 = ssub.s32 128, 128
          %142 = vsyncadd %s136, %s141
          %s143 = smul.addr %s20, 2
          %s144 = smul.addr %s21, 2
          %s145 = sadd.s32 %s143, %s144
          %s146 = smul.addr %s145, 64
          %s147 = scalar_lea.hbm %s1, %s146
          %s149 = sshll.u32 %s139, 4
          %s150 = int_to_ptr.vmem [resolvable:$true] %s149
          %152 = dma.hbm_to_vmem [thread:$0]  %s147, 128, %s150, %s136
        $region24: #{_simcc_loss_impl.1} parent=19 // pred_fallthru
          _
      $region20: #{_simcc_loss_impl.1} parent=5 // pred_fallthru
        _
      %p153 = scmp.le.s32.totalorder 1, %s13
      %p154 = scmp.lt.s32.totalorder %s13, 3
      %p155 = pnand %p153, %p154
      %p156 = pneg %p155
      // Predicated region
      $region25: #{_simcc_loss_impl.1} parent=5 // pred_check
        _
      $region26: #{_simcc_loss_impl.1} parent=5 // pred_check_branch
        %158 = sbr.rel (%p155) target = $region28
      $region27: #{_simcc_loss_impl.1} parent=5 // pred_region
        %s159 = ssub.s32 %s13, 1
        // Predicated region
        $region29: #{_simcc_loss_impl.1} parent=27 // pred_check
          %p160 = pneg %p46
        $region30: #{_simcc_loss_impl.1} parent=27 // pred_check_branch
          %162 = sbr.rel (%p160) target = $region32
        $region31: #{_simcc_loss_impl.1} parent=27 // pred_region
          %163 = dma.done [#allocation4], 4096
        $region32: #{_simcc_loss_impl.1} parent=27 // pred_fallthru
          _
        %s164 = sand.u32 %s61, 1
        %s165 = scalar_lea.sflag [#allocation7], %s164
        %s166 = sand.u32 %s61, 1
        %s167 = smul.addr %s166, 8
        %s168 = scalar_lea.vmem [#allocation6], %s167
        // Predicated region
        $region33: #{_simcc_loss_impl.1} parent=27 // pred_check
          %p169 = pneg %p74
        $region34: #{_simcc_loss_impl.1} parent=27 // pred_check_branch
          %171 = sbr.rel (%p169) target = $region36
        $region35: #{_simcc_loss_impl.1} parent=27 // pred_region
          %172 = dma.done %s165, 128
        $region36: #{_simcc_loss_impl.1} parent=27 // pred_fallthru
          _
        %p173 = pneg %p46
        %p174 = pneg %p43
        %s175 = sand.u32 %s61, 1
        %s176 = scalar_lea.sflag [#allocation7], %s175
        %s177 = sand.u32 %s61, 1
        %s178 = smul.addr %s177, 8
        %s179 = scalar_lea.vmem [#allocation6], %s178
        %p180 = pneg %p74
        %p181 = pneg %p71
        %p182 = pneg %p100
        %p183 = pneg %p97
        %v184 = vld [vmem:[%s168] sm:$0xff]
        %p185 = scmp.eq.s32.totalorder %s23, 0
        // Predicated region
        $region37: #{_simcc_loss_impl.1} parent=27 // pred_check
          %p186 = pneg %p185
        $region38: #{_simcc_loss_impl.1} parent=27 // pred_check_branch
          %188 = sbr.rel (%p186) target = $region40
        $region39: #{_simcc_loss_impl.1} parent=27 // pred_region
          %189 = vst [vmem:[#allocation2] sm:$0xff] 0.0
          %190 = vst [vmem:[#allocation8] sm:$0xff] 0.0
        $region40: #{_simcc_loss_impl.1} parent=27 // pred_fallthru
          _
        %v191 = vld [vmem:[#allocation2] sm:$0xff]
        %v192 = vadd.f32 %v191, %v184
        %193 = vst [vmem:[#allocation2] sm:$0xff] %v192
        %v194 = vld [vmem:[#allocation3] sm:$0xff]
        %v195 = vld [vmem:[#allocation3 + $0x8] sm:$0xff]
        %v196 = vld [vmem:[#allocation3 + $0x10] sm:$0xff]
        %v197 = vld [vmem:[#allocation3 + $0x18] sm:$0xff]
        %v198 = vld [vmem:[#allocation3 + $0x20] sm:$0xff]
        %v199 = vld [vmem:[#allocation3 + $0x28] sm:$0xff]
        %v200 = vld [vmem:[#allocation3 + $0x30] sm:$0xff]
        %v201 = vld [vmem:[#allocation3 + $0x38] sm:$0xff]
        %v202 = vld [vmem:[#allocation3 + $0x40] sm:$0xff]
        %v203 = vld [vmem:[#allocation3 + $0x48] sm:$0xff]
        %v204 = vld [vmem:[#allocation3 + $0x50] sm:$0xff]
        %v205 = vld [vmem:[#allocation3 + $0x58] sm:$0xff]
        %v206 = vld [vmem:[#allocation3 + $0x60] sm:$0xff]
        %v207 = vld [vmem:[#allocation3 + $0x68] sm:$0xff]
        %v208 = vld [vmem:[#allocation3 + $0x70] sm:$0xff]
        %v209 = vld [vmem:[#allocation3 + $0x78] sm:$0xff]
        %v210 = vld [vmem:[#allocation3 + $0x80] sm:$0xff]
        %v211 = vld [vmem:[#allocation3 + $0x88] sm:$0xff]
        %v212 = vld [vmem:[#allocation3 + $0x90] sm:$0xff]
        %v213 = vld [vmem:[#allocation3 + $0x98] sm:$0xff]
        %v214 = vld [vmem:[#allocation3 + $0xa0] sm:$0xff]
        %v215 = vld [vmem:[#allocation3 + $0xa8] sm:$0xff]
        %v216 = vld [vmem:[#allocation3 + $0xb0] sm:$0xff]
        %v217 = vld [vmem:[#allocation3 + $0xb8] sm:$0xff]
        %v218 = vld [vmem:[#allocation3 + $0xc0] sm:$0xff]
        %v219 = vld [vmem:[#allocation3 + $0xc8] sm:$0xff]
        %v220 = vld [vmem:[#allocation3 + $0xd0] sm:$0xff]
        %v221 = vld [vmem:[#allocation3 + $0xd8] sm:$0xff]
        %v222 = vld [vmem:[#allocation3 + $0xe0] sm:$0xff]
        %v223 = vld [vmem:[#allocation3 + $0xe8] sm:$0xff]
        %v224 = vld [vmem:[#allocation3 + $0xf0] sm:$0xff]
        %v225 = vld [vmem:[#allocation3 + $0xf8] sm:$0xff]
        %v227 = vcombine.high %v184, %v184
        %229 = vmatprep.subr.mxu0 0.0
        %230 = vmatpush1.msra.mxu0 %v194
        %231 = vmatprep.subr.mxu0 0.0
        %232 = vmatpush1.msra.mxu0 %v195
        %233 = vmatprep.subr.mxu0 0.0
        %234 = vmatpush1.msra.mxu0 %v196
        %235 = vmatprep.subr.mxu0 0.0
        %236 = vmatpush1.msra.mxu0 %v197
        %237 = vmatprep.subr.mxu0 0.0
        %238 = vmatpush1.msra.mxu0 %v198
        %239 = vmatprep.subr.mxu0 0.0
        %240 = vmatpush1.msra.mxu0 %v199
        %241 = vmatprep.subr.mxu0 0.0
        %242 = vmatpush1.msra.mxu0 %v200
        %243 = vmatprep.subr.mxu0 0.0
        %244 = vmatpush1.msra.mxu0 %v201
        %245 = vmatprep.subr.mxu0 0.0
        %246 = vmatpush1.msra.mxu0 %v202
        %247 = vmatprep.subr.mxu0 0.0
        %248 = vmatpush1.msra.mxu0 %v203
        %249 = vmatprep.subr.mxu0 0.0
        %250 = vmatpush1.msra.mxu0 %v204
        %251 = vmatprep.subr.mxu0 0.0
        %252 = vmatpush1.msra.mxu0 %v205
        %253 = vmatprep.subr.mxu0 0.0
        %254 = vmatpush1.msra.mxu0 %v206
        %255 = vmatprep.subr.mxu0 0.0
        %256 = vmatpush1.msra.mxu0 %v207
        %257 = vmatprep.subr.mxu0 0.0
        %258 = vmatpush1.msra.mxu0 %v208
        %259 = vmatprep.subr.mxu0 0.0
        %260 = vmatpush1.msra.mxu0 %v209
        %261 = vmatprep.subr.mxu0 0.0
        %262 = vmatpush1.msra.mxu0 %v210
        %263 = vmatprep.subr.mxu0 0.0
        %264 = vmatpush1.msra.mxu0 %v211
        %265 = vmatprep.subr.mxu0 0.0
        %266 = vmatpush1.msra.mxu0 %v212
        %267 = vmatprep.subr.mxu0 0.0
        %268 = vmatpush1.msra.mxu0 %v213
        %269 = vmatprep.subr.mxu0 0.0
        %270 = vmatpush1.msra.mxu0 %v214
        %271 = vmatprep.subr.mxu0 0.0
        %272 = vmatpush1.msra.mxu0 %v215
        %273 = vmatprep.subr.mxu0 0.0
        %274 = vmatpush1.msra.mxu0 %v216
        %275 = vmatprep.subr.mxu0 0.0
        %276 = vmatpush1.msra.mxu0 %v217
        %277 = vmatprep.subr.mxu0 0.0
        %278 = vmatpush1.msra.mxu0 %v218
        %279 = vmatprep.subr.mxu0 0.0
        %280 = vmatpush1.msra.mxu0 %v219
        %281 = vmatprep.subr.mxu0 0.0
        %282 = vmatpush1.msra.mxu0 %v220
        %283 = vmatprep.subr.mxu0 0.0
        %284 = vmatpush1.msra.mxu0 %v221
        %285 = vmatprep.subr.mxu0 0.0
        %286 = vmatpush1.msra.mxu0 %v222
        %287 = vmatprep.subr.mxu0 0.0
        %288 = vmatpush1.msra.mxu0 %v223
        %289 = vmatprep.subr.mxu0 0.0
        %290 = vmatpush1.msra.mxu0 %v224
        %291 = vmatprep.subr.mxu0 0.0
        %292 = vmatpush1.msra.mxu0 %v225
        %293 = vmatprep.mubr.f32.mxu0 %v227
        %294 = vmatmul.mubr.f32.gmra.mrb[0].mxu0 %v184
        %v295 = vpop.f32.mrb[0].mxu0
        %v296 = vadd.f32 0.0, %v295
        %v297 = vpop.f32.mrb[0].mxu0
        %298 = vdwg.mxu0
        %vm299 = vcmask 125952
        %v300 = vsel %vm299, %v296, -inf
        %301 = vmax.xlane.f32.xlu0 %v300
        %v302 = vpop.xlane.xlu0 %301
        %v303 = vsub.f32 %v296, %v302
        %v304 = vmul.f32 %v303, 1.442695
        %v305 = vpow.pop %v304
        %v306 = vsel %vm299, %v305, 0.0
        %307 = vadd.xlane.f32.xlu0 %v306
        %v308 = vpop.xlane.xlu0 %307
        %v309 = vlog2.pop %v308
        %v310 = vmul.f32 %v309, 0.6931472
        %v311 = vmul.f32 %v305, %v303
        %v312 = vsel %vm299, %v311, 0.0
        %313 = vadd.xlane.f32.xlu0 %v312
        %v314 = vpop.xlane.xlu0 %313
        %v315 = vrcp.pop %v308
        %v316 = vmul.f32 %v314, %v315
        %v317 = vsub.f32 %v310, %v316
        %vm318 = vcmask 3072
        %v319 = vsel %vm318, %v317, 0.0
        %320 = vadd.xlane.f32.xlu0 %v319
        %v321 = vpop.xlane.xlu0 %320
        %v322 = vrot.slane %v321, 4
        %v323 = vadd.f32 %v321, %v322
        %v324 = vrot.slane %v323, 2
        %v325 = vadd.f32 %v323, %v324
        %v326 = vrot.slane %v325, 1
        %v327 = vadd.f32 %v325, %v326
        %s328 = vtos %v327
        %vm329 = vcmask 257152
        %v330 = vsel %vm329, %v296, -inf
        %331 = vmax.xlane.f32.xlu0 %v330
        %v332 = vpop.xlane.xlu0 %331
        %v333 = vsub.f32 %v296, %v332
        %v334 = vmul.f32 %v333, 1.442695
        %v335 = vpow.pop %v334
        %337 = vrot.lane.b32.xlu0 %v335, 112
        %v338 = vpop.permute.xlu0 %337
        %v340 = vsel %vm299, %v338, 0.0
        %341 = vadd.xlane.f32.xlu0 %v340
        %v342 = vpop.xlane.xlu0 %341
        %v343 = vlog2.pop %v342
        %v344 = vmul.f32 %v343, 0.6931472
        %v345 = vmul.f32 %v335, %v333
        %347 = vrot.lane.b32.xlu0 %v345, 112
        %v348 = vpop.permute.xlu0 %347
        %v350 = vsel %vm299, %v348, 0.0
        %351 = vadd.xlane.f32.xlu0 %v350
        %v352 = vpop.xlane.xlu0 %351
        %v353 = vrcp.pop %v342
        %v354 = vmul.f32 %v352, %v353
        %v355 = vsub.f32 %v344, %v354
        %v356 = vsel %vm318, %v355, 0.0
        %357 = vadd.xlane.f32.xlu0 %v356
        %v358 = vpop.xlane.xlu0 %357
        %v359 = vrot.slane %v358, 4
        %v360 = vadd.f32 %v358, %v359
        %v361 = vrot.slane %v360, 2
        %v362 = vadd.f32 %v360, %v361
        %v363 = vrot.slane %v362, 1
        %v364 = vadd.f32 %v362, %v363
        %s365 = vtos %v364
        %v366 = vld [vmem:[#allocation8] sm:$0x1]
        %v367 = vstv %s328
        %v368 = vadd.f32 %v366, %v367
        %369 = vst [vmem:[#allocation8] sm:$0x1] %v368
        %v370 = vld [vmem:[#allocation8 + $0x1] sm:$0x1]
        %v371 = vstv %s365
        %v372 = vadd.f32 %v370, %v371
        %373 = vst [vmem:[#allocation8 + $0x1] sm:$0x1] %v372
        %p374 = scmp.eq.s32.totalorder %s23, 1
        // Predicated region
        $region41: #{_simcc_loss_impl.1} parent=27 // pred_check
          %p375 = pneg %p374
        $region42: #{_simcc_loss_impl.1} parent=27 // pred_check_branch
          %377 = sbr.rel (%p375) target = $region44
        $region43: #{_simcc_loss_impl.1} parent=27 // pred_region
          %v378 = vld [vmem:[#allocation2] sm:$0xff]
          %v379 = vmul.f32 %v378, 0.5
          %v381 = vcombine.high %v379, %v379
          %vm383 = vcmask 1043456
          %v384 = vsel %vm383, %v379, -inf
          %v385 = vsel %vm383, %v381, -inf
          %v386 = vmax.f32 %v384, %v385
          %387 = vmax.xlane.f32.xlu0 %v386
          %v388 = vpop.xlane.xlu0 %387
          %v391 = vunpack.c.l.s4 839922192
          %v392 = vunpack.c.0.s8 %v391
          %v393 = vlaneseq
          %v394 = vshrl.u32 %v393, 7
          %v395 = vsub.s32 %v392, %v394
          %v396 = vrot.slane %v388, %v395
          %v398 = vsub.f32 %v379, %v396
          %v399 = vmul.f32 %v398, 1.442695
          %v400 = vpow.pop %v399
          %v402 = vcombine.high %v400, %v400
          %v404 = vsel %vm383, %v400, 0.0
          %v405 = vsel %vm383, %v402, 0.0
          %v406 = vadd.f32 %v404, %v405
          %407 = vadd.xlane.f32.xlu0 %v406
          %v408 = vpop.xlane.xlu0 %407
          %v409 = vlog2.pop %v408
          %v410 = vmul.f32 %v409, 0.6931472
          %v411 = vmul.f32 %v400, %v398
          %v413 = vcombine.high %v411, %v411
          %v415 = vsel %vm383, %v411, 0.0
          %v416 = vsel %vm383, %v413, 0.0
          %v417 = vadd.f32 %v415, %v416
          %418 = vadd.xlane.f32.xlu0 %v417
          %v419 = vpop.xlane.xlu0 %418
          %v420 = vrcp.pop %v408
          %v421 = vmul.f32 %v419, %v420
          %v422 = vsub.f32 %v410, %v421
          %v423 = vsel %vm318, %v422, 0.0
          %424 = vadd.xlane.f32.xlu0 %v423
          %v425 = vpop.xlane.xlu0 %424
          %v426 = vrot.slane %v425, 4
          %v427 = vadd.f32 %v425, %v426
          %v428 = vrot.slane %v427, 2
          %v429 = vadd.f32 %v427, %v428
          %v430 = vrot.slane %v429, 1
          %v431 = vadd.f32 %v429, %v430
          %s432 = vtos %v431
          %v433 = vstv %s432
          %434 = vst [vmem:[#allocation8 + $0x2] sm:$0x1] %v433
        $region44: #{_simcc_loss_impl.1} parent=27 // pred_fallthru
          _
        // Predicated region
        $region45: #{_simcc_loss_impl.1} parent=27 // pred_check
          %p435 = pneg %p97
        $region46: #{_simcc_loss_impl.1} parent=27 // pred_check_branch
          %437 = sbr.rel (%p435) target = $region48
        $region47: #{_simcc_loss_impl.1} parent=27 // pred_region
          %s439 = ssub.s32 128, 128
          %440 = vsyncadd [#allocation5], %s439
          %s441 = smul.addr %s22, 128
          %s442 = scalar_lea.hbm %s2, %s441
          %s444 = sshll.u32 [#allocation8], 4
          %s445 = int_to_ptr.vmem [resolvable:$true] %s444
          %447 = dma.vmem_to_hbm [thread:$0]  %s445, 128, %s442, [#allocation5]
        $region48: #{_simcc_loss_impl.1} parent=27 // pred_fallthru
          _
        // Predicated region
        $region49: #{_simcc_loss_impl.1} parent=27 // pred_check
          %p448 = pneg %p97
        $region50: #{_simcc_loss_impl.1} parent=27 // pred_check_branch
          %450 = sbr.rel (%p448) target = $region52
        $region51: #{_simcc_loss_impl.1} parent=27 // pred_region
          %451 = dma.done [#allocation5], 128
        $region52: #{_simcc_loss_impl.1} parent=27 // pred_fallthru
          _
      $region28: #{_simcc_loss_impl.1} parent=5 // pred_fallthru
        _
      %p452 = scmp.le.s32.totalorder 2, %s13
      // Predicated region
      $region53: #{_simcc_loss_impl.1} parent=5 // pred_check
        %p453 = pneg %p452
      $region54: #{_simcc_loss_impl.1} parent=5 // pred_check_branch
        %455 = sbr.rel (%p453) target = $region56
      $region55: #{_simcc_loss_impl.1} parent=5 // pred_region
        %s456 = ssub.s32 %s13, 2
      $region56: #{_simcc_loss_impl.1} parent=5 // pred_fallthru
        _
    $region6: #{_simcc_loss_impl.1} parent=1 // loop_footer
      %s17 = sadd.s32 1, %s13
    $region7: #{_simcc_loss_impl.1} parent=1 // loop_footer_branch
      %12 = sbr.rel target = $region3
    $region8: #{_simcc_loss_impl.1} parent=1 // loop_exit
      _
    %457 = vsyncpa [#allocation4], 1
    %s458 = scalar_lea.sflag [#allocation4], 1
    %459 = vsyncpa %s458, 1
    %460 = vsyncpa [#allocation7], 1
    %s461 = scalar_lea.sflag [#allocation7], 1
    %462 = vsyncpa %s461, 1
    %463 = vsyncpa [#allocation5], 1
    %s464 = scalar_lea.sflag [#allocation5], 1
    %465 = vsyncpa %s464, 1

</llo_original>
